<compile_context>
chip_gen: v7x
topology: tpu7x:2x2x1
jax: 0.10.0
libtpu: 0.0.40
codegen_flags: <defaults>
</compile_context>

<pallas_src>
import jax
import jax.numpy as jnp
from jax.experimental import pallas as pl
from jax.experimental.pallas import tpu as pltpu


def _round_up(n, m):
    return ((n + m - 1) // m) * m


def _lenet_nj_kernel(x_ref,
                     w1_ref, b1_ref,
                     w2_ref, b2_ref,
                     w3_ref, b3_ref,
                     o_ref):
    # z_mu already folded into weights; weights padded to lane multiples.
    x = x_ref[...].astype(w1_ref.dtype)

    # fc1 + ReLU   (accumulate in f32 on the MXU, elementwise in f32)
    h = jnp.dot(x, w1_ref[...], preferred_element_type=jnp.float32) + b1_ref[...]
    h = jnp.maximum(h, 0.0)

    # fc2 + ReLU
    h = jnp.dot(h.astype(w2_ref.dtype), w2_ref[...],
                preferred_element_type=jnp.float32) + b2_ref[...]
    h = jnp.maximum(h, 0.0)

    # fc3 (lane-dense, zero-padded output columns)
    y = jnp.dot(h.astype(w3_ref.dtype), w3_ref[...],
                preferred_element_type=jnp.float32) + b3_ref[...]
    o_ref[...] = y.astype(o_ref.dtype)


def prepare_params(params, weight_dtype=jnp.float32):
    """One-time param prep: fold z_mu into transposed weights, pad to lane
    multiples. Done outside the hot forward path (no per-call .T / pads)."""
    i_dim = params["w1"].shape[1]
    h1 = params["w1"].shape[0]          # 300
    h2 = params["w2"].shape[0]          # 100
    o_dim = params["w3"].shape[0]

    h1p = _round_up(h1, 128)            # 384
    h2p = _round_up(h2, 128)            # 128
    op = _round_up(o_dim, 128)          # 128

    def fold(w, z, out_pad):
        wt = (w.T * z[:, None]).astype(weight_dtype)        # (in, out)
        return jnp.pad(wt, ((0, 0), (0, out_pad - wt.shape[1])))

    def pad_bias(b, out_pad):
        return jnp.pad(b, (0, out_pad - b.shape[0])).astype(jnp.float32)[None, :]

    w1p = fold(params["w1"], params["z1"], h1p)                       # (i_dim, h1p)
    w2p = jnp.pad(fold(params["w2"], params["z2"], h2p),
                  ((0, h1p - h1), (0, 0)))                            # (h1p, h2p)
    w3p = jnp.pad(fold(params["w3"], params["z3"], op),
                  ((0, h2p - h2), (0, 0)))                            # (h2p, op)

    return {
        "w1": w1p, "b1": pad_bias(params["b1"], h1p),
        "w2": w2p, "b2": pad_bias(params["b2"], h2p),
        "w3": w3p, "b3": pad_bias(params["b3"], op),
        "i_dim": i_dim, "o_dim": o_dim, "h1p": h1p, "h2p": h2p, "op": op,
    }


def lenet300_100j_regress_forward(x, pp, *, tb=512):
    """x: (B, i_dim) float32. pp: output of prepare_params."""
    B, i_dim = x.shape
    assert i_dim == pp["i_dim"]
    o_dim, op = pp["o_dim"], pp["op"]
    h1p, h2p = pp["h1p"], pp["h2p"]

    # Batch tile: multiple of 8 sublanes, capped at the (padded) batch size.
    tb = min(_round_up(tb, 8), _round_up(B, 8))
    b_pad = _round_up(B, tb)
    if b_pad != B:
        x = jnp.pad(x, ((0, b_pad - B), (0, 0)))
    grid = (b_pad // tb,)

    # Explicit VMEM budget: double-buffered activation tiles + resident
    # (double-buffered) weights/biases + f32 intermediates.
    wbytes = jnp.dtype(pp["w1"].dtype).itemsize
    need = (2 * (tb * i_dim + tb * op) * 4
            + 2 * (i_dim * h1p + h1p * h2p + h2p * op) * wbytes
            + 2 * (h1p + h2p + op) * 4
            + tb * (h1p + h2p) * 4)
    vmem_limit = int(min(max(2 * need, 16 * 1024 * 1024), 64 * 1024 * 1024))

    out = pl.pallas_call(
        _lenet_nj_kernel,
        out_shape=jax.ShapeDtypeStruct((b_pad, op), jnp.float32),
        grid=grid,
        in_specs=[
            pl.BlockSpec((tb, i_dim), lambda i: (i, 0)),      # x tile (pipelined)
            pl.BlockSpec((i_dim, h1p), lambda i: (0, 0)),     # resident weights
            pl.BlockSpec((1, h1p), lambda i: (0, 0)),
            pl.BlockSpec((h1p, h2p), lambda i: (0, 0)),
            pl.BlockSpec((1, h2p), lambda i: (0, 0)),
            pl.BlockSpec((h2p, op), lambda i: (0, 0)),
            pl.BlockSpec((1, op), lambda i: (0, 0)),
        ],
        out_specs=pl.BlockSpec((tb, op), lambda i: (i, 0)),   # lane-dense output
        compiler_params=pltpu.CompilerParams(
            dimension_semantics=("parallel",),
            vmem_limit_bytes=vmem_limit,
        ),
    )(x, pp["w1"], pp["b1"], pp["w2"], pp["b2"], pp["w3"], pp["b3"])

    return out[:B, :o_dim]


def _reference_forward(x, params):
    h = jnp.maximum((x * params["z1"]) @ params["w1"].T + params["b1"], 0.0)
    h = jnp.maximum((h * params["z2"]) @ params["w2"].T + params["b2"], 0.0)
    return (h * params["z3"]) @ params["w3"].T + params["b3"]


def init_params(key, i_dim, o_dim):
    """Deterministic synthetic init mirroring LinearGroupNJ shapes:
       weight_mu (out, in), bias_mu (out,), z_mu (in,) ~ N(1, 1e-2)."""
    ks = jax.random.split(key, 9)

    def w(k, out_f, in_f):
        std = 1.0 / jnp.sqrt(in_f)
        return jax.random.normal(k, (out_f, in_f), jnp.float32) * std

    def b(k, out_f):
        return jax.random.normal(k, (out_f,), jnp.float32) * 0.01

    def z(k, in_f):
        return 1.0 + 0.01 * jax.random.normal(k, (in_f,), jnp.float32)

    return {
        "w1": w(ks[0], 300, i_dim), "b1": b(ks[1], 300), "z1": z(ks[2], i_dim),
        "w2": w(ks[3], 100, 300),   "b2": b(ks[4], 100), "z2": z(ks[5], 300),
        "w3": w(ks[6], o_dim, 100), "b3": b(ks[7], o_dim), "z3": z(ks[8], 100),
    }


if __name__ == "__main__":
    i_dim, o_dim, batch = 32, 8, 8

    key = jax.random.PRNGKey(0)
    k_x, k_p = jax.random.split(key)
    x = jax.random.normal(k_x, (batch, i_dim), jnp.float32)
    params = init_params(k_p, i_dim, o_dim)

    # One-time prep (fold z, transpose, pad). Keep f32 here so the check vs the
    # f32 reference is exact; pass weight_dtype=jnp.bfloat16 on v6e/v7x for perf.
    prepped = prepare_params(params, weight_dtype=jnp.float32)

    out = lenet300_100j_regress_forward(x, prepped)
    out = jax.block_until_ready(out)

    ref = _reference_forward(x, params)
    assert out.shape == (batch, o_dim)
    assert jnp.allclose(out, ref, atol=1e-4, rtol=1e-4), "mismatch vs reference"

    print("KERNEL_OK")
</pallas_src>

<mosaic_0001>
module attributes {stable_mosaic.version = 11 : i64} {
  func.func @_lenet_nj_kernel(%arg0: i32, %arg1: memref<8x32xf32, #tpu.memory_space<vmem>>, %arg2: memref<32x384xf32, #tpu.memory_space<vmem>>, %arg3: memref<1x384xf32, #tpu.memory_space<vmem>>, %arg4: memref<384x128xf32, #tpu.memory_space<vmem>>, %arg5: memref<1x128xf32, #tpu.memory_space<vmem>>, %arg6: memref<128x128xf32, #tpu.memory_space<vmem>>, %arg7: memref<1x128xf32, #tpu.memory_space<vmem>>, %arg8: memref<8x128xf32, #tpu.memory_space<vmem>>) attributes {dimension_semantics = [#tpu.dimension_semantics<parallel>], iteration_bounds = array<i64: 1>, scalar_prefetch = 0 : i64, scratch_operands = 0 : i64, tpu.core_type = #tpu.core_type<tc>, window_params = [{transform_indices = @transform_0, window_bounds = array<i64: 8, 32>}, {pipeline_mode = #tpu.pipeline_mode<synchronous>, transform_indices = @transform_1, window_bounds = array<i64: 32, 384>}, {pipeline_mode = #tpu.pipeline_mode<synchronous>, transform_indices = @transform_2, window_bounds = array<i64: 1, 384>}, {pipeline_mode = #tpu.pipeline_mode<synchronous>, transform_indices = @transform_3, window_bounds = array<i64: 384, 128>}, {pipeline_mode = #tpu.pipeline_mode<synchronous>, transform_indices = @transform_4, window_bounds = array<i64: 1, 128>}, {pipeline_mode = #tpu.pipeline_mode<synchronous>, transform_indices = @transform_5, window_bounds = array<i64: 128, 128>}, {pipeline_mode = #tpu.pipeline_mode<synchronous>, transform_indices = @transform_6, window_bounds = array<i64: 1, 128>}, {transform_indices = @transform_7, window_bounds = array<i64: 8, 128>}]} {
    %c0 = arith.constant 0 : index
    %c0_0 = arith.constant 0 : index
    %0 = vector.load %arg1[%c0, %c0_0] : memref<8x32xf32, #tpu.memory_space<vmem>>, vector<8x32xf32>
    %c0_1 = arith.constant 0 : index
    %c0_2 = arith.constant 0 : index
    %1 = vector.load %arg2[%c0_1, %c0_2] : memref<32x384xf32, #tpu.memory_space<vmem>>, vector<32x384xf32>
    %cst = arith.constant dense<0.000000e+00> : vector<8x384xf32>
    %2 = tpu.matmul %0, %1, %cst {dimension_numbers = #tpu.dot_dimension_numbers<[1], [0], [0], [1], [0, 0, 1, 1], [], []>} : vector<8x32xf32>, vector<32x384xf32>, vector<8x384xf32> -> vector<8x384xf32>
    %c0_3 = arith.constant 0 : index
    %c0_4 = arith.constant 0 : index
    %3 = vector.load %arg3[%c0_3, %c0_4] : memref<1x384xf32, #tpu.memory_space<vmem>>, vector<1x384xf32>
    %4 = vector.broadcast %3 : vector<1x384xf32> to vector<8x384xf32>
    %5 = arith.addf %2, %4 : vector<8x384xf32>
    %cst_5 = arith.constant 0.000000e+00 : f32
    %6 = vector.broadcast %cst_5 : f32 to vector<8x384xf32>
    %7 = arith.maximumf %5, %6 : vector<8x384xf32>
    %c0_6 = arith.constant 0 : index
    %c0_7 = arith.constant 0 : index
    %8 = vector.load %arg4[%c0_6, %c0_7] : memref<384x128xf32, #tpu.memory_space<vmem>>, vector<384x128xf32>
    %cst_8 = arith.constant dense<0.000000e+00> : vector<8x128xf32>
    %9 = tpu.matmul %7, %8, %cst_8 {dimension_numbers = #tpu.dot_dimension_numbers<[1], [0], [0], [1], [0, 0, 1, 1], [], []>} : vector<8x384xf32>, vector<384x128xf32>, vector<8x128xf32> -> vector<8x128xf32>
    %c0_9 = arith.constant 0 : index
    %c0_10 = arith.constant 0 : index
    %10 = vector.load %arg5[%c0_9, %c0_10] : memref<1x128xf32, #tpu.memory_space<vmem>>, vector<1x128xf32>
    %11 = vector.broadcast %10 : vector<1x128xf32> to vector<8x128xf32>
    %12 = arith.addf %9, %11 : vector<8x128xf32>
    %cst_11 = arith.constant 0.000000e+00 : f32
    %13 = vector.broadcast %cst_11 : f32 to vector<8x128xf32>
    %14 = arith.maximumf %12, %13 : vector<8x128xf32>
    %c0_12 = arith.constant 0 : index
    %c0_13 = arith.constant 0 : index
    %15 = vector.load %arg6[%c0_12, %c0_13] : memref<128x128xf32, #tpu.memory_space<vmem>>, vector<128x128xf32>
    %cst_14 = arith.constant dense<0.000000e+00> : vector<8x128xf32>
    %16 = tpu.matmul %14, %15, %cst_14 {dimension_numbers = #tpu.dot_dimension_numbers<[1], [0], [0], [1], [0, 0, 1, 1], [], []>} : vector<8x128xf32>, vector<128x128xf32>, vector<8x128xf32> -> vector<8x128xf32>
    %c0_15 = arith.constant 0 : index
    %c0_16 = arith.constant 0 : index
    %17 = vector.load %arg7[%c0_15, %c0_16] : memref<1x128xf32, #tpu.memory_space<vmem>>, vector<1x128xf32>
    %18 = vector.broadcast %17 : vector<1x128xf32> to vector<8x128xf32>
    %19 = arith.addf %16, %18 : vector<8x128xf32>
    %c0_17 = arith.constant 0 : index
    %c0_18 = arith.constant 0 : index
    %20 = vector.load %arg8[%c0_17, %c0_18] : memref<8x128xf32, #tpu.memory_space<vmem>>, vector<8x128xf32>
    tpu.vector_store %arg8[%c0_17, %c0_18], %19 {strides = array<i32>} : memref<8x128xf32, #tpu.memory_space<vmem>>, vector<8x128xf32>,
    return
  }
  func.func @transform_0(%arg0: i32) -> (i32, i32) {
    %c0_i32 = arith.constant 0 : i32
    %c0_i32_0 = arith.constant 0 : i32
    return %arg0, %c0_i32 : i32, i32
  }
  func.func @transform_1(%arg0: i32) -> (i32, i32) {
    %c0_i32 = arith.constant 0 : i32
    %c0_i32_0 = arith.constant 0 : i32
    %c0_i32_1 = arith.constant 0 : i32
    return %c0_i32, %c0_i32_0 : i32, i32
  }
  func.func @transform_2(%arg0: i32) -> (i32, i32) {
    %c0_i32 = arith.constant 0 : i32
    %c0_i32_0 = arith.constant 0 : i32
    %c0_i32_1 = arith.constant 0 : i32
    return %c0_i32, %c0_i32_0 : i32, i32
  }
  func.func @transform_3(%arg0: i32) -> (i32, i32) {
    %c0_i32 = arith.constant 0 : i32
    %c0_i32_0 = arith.constant 0 : i32
    %c0_i32_1 = arith.constant 0 : i32
    return %c0_i32, %c0_i32_0 : i32, i32
  }
  func.func @transform_4(%arg0: i32) -> (i32, i32) {
    %c0_i32 = arith.constant 0 : i32
    %c0_i32_0 = arith.constant 0 : i32
    %c0_i32_1 = arith.constant 0 : i32
    return %c0_i32, %c0_i32_0 : i32, i32
  }
  func.func @transform_5(%arg0: i32) -> (i32, i32) {
    %c0_i32 = arith.constant 0 : i32
    %c0_i32_0 = arith.constant 0 : i32
    %c0_i32_1 = arith.constant 0 : i32
    return %c0_i32, %c0_i32_0 : i32, i32
  }
  func.func @transform_6(%arg0: i32) -> (i32, i32) {
    %c0_i32 = arith.constant 0 : i32
    %c0_i32_0 = arith.constant 0 : i32
    %c0_i32_1 = arith.constant 0 : i32
    return %c0_i32, %c0_i32_0 : i32, i32
  }
  func.func @transform_7(%arg0: i32) -> (i32, i32) {
    %c0_i32 = arith.constant 0 : i32
    %c0_i32_0 = arith.constant 0 : i32
    return %arg0, %c0_i32 : i32, i32
  }
}

</mosaic_0001>

<llo_original>
// kernel: tpu_custom_call.1
$region0: #{tpu_custom_call.1}
  #allocation0 [shape = 'u32[]', space=smem, size = 0x4, offset = 0x4, fixed_abs, tag = 'smem constant byte address 0x4 - core index']
  #allocation1 [shape = 'u32[144,128]{1,0:T(1,128)}', space=vmem, size = 0x12000, scoped, tag = 'internal scratch']
  %s0 = inlined_call_operand.hbm [shape: f32[8,32], index: 0, kind: input, shape index: {}]
  %s1 = inlined_call_operand.hbm [shape: f32[32,384], index: 1, kind: input, shape index: {}]
  %s2 = inlined_call_operand.vmem [shape: f32[1,384], index: 2, kind: input, shape index: {}]
  %s3 = inlined_call_operand.hbm [shape: f32[384,128], index: 3, kind: input, shape index: {}]
  %s4 = inlined_call_operand.vmem [shape: f32[1,128], index: 4, kind: input, shape index: {}]
  %s5 = inlined_call_operand.hbm [shape: f32[128,128], index: 5, kind: input, shape index: {}]
  %s6 = inlined_call_operand.vmem [shape: f32[1,128], index: 6, kind: input, shape index: {}]
  %s7 = inlined_call_operand.hbm [shape: f32[8,128], index: 7, kind: output, shape index: {}]
  %s8 = sld [smem:[#allocation0]]
  $region54: #{tpu_custom_call.1} parent=0
    _
  %s10 = ssub.s32 1, %s8
  %s11 = scalar_select 0, %s10, %s8
  $region1: #{tpu_custom_call.1} parent=0
    #allocation2 [shape = 'u8[4096]{0}', space=vmem, size = 0x1000, scoped, tag = 'input window, operand 0, single buffered']
    #allocation3 [shape = 's32[1]{0}', space=sflag, size = 0x4, scoped, tag = 'scoped memory for tpu_custom_call.1']
    #allocation4 [shape = 's32[1]{0}', space=sflag, size = 0x4, scoped, tag = 'scoped memory for tpu_custom_call.1']
    #allocation5 [shape = 'u8[49152]{0}', space=vmem, size = 0xc000, scoped, tag = 'input window, operand 1, single buffered']
    #allocation6 [shape = 's32[1]{0}', space=sflag, size = 0x4, scoped, tag = 'scoped memory for tpu_custom_call.1']
    #allocation7 [shape = 'u8[196608]{0}', space=vmem, size = 0x30000, scoped, tag = 'input window, operand 3, single buffered']
    #allocation8 [shape = 'u8[65536]{0}', space=vmem, size = 0x10000, scoped, tag = 'input window, operand 5, single buffered']
    #allocation9 [shape = 's32[1]{0}', space=sflag, size = 0x4, scoped, tag = 'scoped memory for tpu_custom_call.1']
    #allocation10 [shape = 'u8[4096]{0}', space=vmem, size = 0x1000, scoped, tag = 'output window, operand 0, single buffered']
    %12 = vsyncpa [#allocation3], 0
    %13 = vsyncpa [#allocation6], 0
    %14 = vsyncpa [#allocation9], 0
    %15 = vsyncpa [#allocation4], 0
    // Predicated region
    $region2: #{tpu_custom_call.1} parent=1 // pred_check
      _
    $region3: #{tpu_custom_call.1} parent=1 // pred_check_branch
      %17 = sbr.rel (0) target = $region5
    $region4: #{tpu_custom_call.1} parent=1 // pred_region
      %s19 = ssub.s32 128, 128
      %20 = vsyncadd [#allocation3], %s19
      %s22 = sshll.u32 [#allocation2], 4
      %s23 = int_to_ptr.vmem [resolvable:$true] %s22
      %25 = dma.hbm_to_vmem [thread:$0]  %s0, 128, %s23, [#allocation3]
    $region5: #{tpu_custom_call.1} parent=1 // pred_fallthru
      _
    // Predicated region
    $region6: #{tpu_custom_call.1} parent=1 // pred_check
      _
    $region7: #{tpu_custom_call.1} parent=1 // pred_check_branch
      %27 = sbr.rel (0) target = $region9
    $region8: #{tpu_custom_call.1} parent=1 // pred_region
      %s29 = ssub.s32 1536, 1536
      %30 = vsyncadd [#allocation6], %s29
      %s31 = sshll.u32 [#allocation5], 4
      %s32 = int_to_ptr.vmem [resolvable:$true] %s31
      %37 = dma.hbm_to_vmem [thread:$0]  %s1, 1536, %s32, [#allocation6], 384, 384, 24
    $region9: #{tpu_custom_call.1} parent=1 // pred_fallthru
      _
    // Predicated region
    $region10: #{tpu_custom_call.1} parent=1 // pred_check
      _
    $region11: #{tpu_custom_call.1} parent=1 // pred_check_branch
      %39 = sbr.rel (0) target = $region13
    $region12: #{tpu_custom_call.1} parent=1 // pred_region
      _
    $region13: #{tpu_custom_call.1} parent=1 // pred_fallthru
      _
    // Predicated region
    $region14: #{tpu_custom_call.1} parent=1 // pred_check
      _
    $region15: #{tpu_custom_call.1} parent=1 // pred_check_branch
      %41 = sbr.rel (0) target = $region17
    $region16: #{tpu_custom_call.1} parent=1 // pred_region
      %s43 = ssub.s32 6144, 6144
      %44 = vsyncadd [#allocation6], %s43
      %s45 = sshll.u32 [#allocation7], 4
      %s46 = int_to_ptr.vmem [resolvable:$true] %s45
      %51 = dma.hbm_to_vmem [thread:$0]  %s3, 6144, %s46, [#allocation6], 128, 128, 8
    $region17: #{tpu_custom_call.1} parent=1 // pred_fallthru
      _
    // Predicated region
    $region18: #{tpu_custom_call.1} parent=1 // pred_check
      _
    $region19: #{tpu_custom_call.1} parent=1 // pred_check_branch
      %53 = sbr.rel (0) target = $region21
    $region20: #{tpu_custom_call.1} parent=1 // pred_region
      _
    $region21: #{tpu_custom_call.1} parent=1 // pred_fallthru
      _
    // Predicated region
    $region22: #{tpu_custom_call.1} parent=1 // pred_check
      _
    $region23: #{tpu_custom_call.1} parent=1 // pred_check_branch
      %55 = sbr.rel (0) target = $region25
    $region24: #{tpu_custom_call.1} parent=1 // pred_region
      %s57 = ssub.s32 2048, 2048
      %58 = vsyncadd [#allocation9], %s57
      %s59 = sshll.u32 [#allocation8], 4
      %s60 = int_to_ptr.vmem [resolvable:$true] %s59
      %65 = dma.hbm_to_vmem [thread:$0]  %s5, 2048, %s60, [#allocation9], 128, 128, 8
    $region25: #{tpu_custom_call.1} parent=1 // pred_fallthru
      _
    // Predicated region
    $region26: #{tpu_custom_call.1} parent=1 // pred_check
      _
    $region27: #{tpu_custom_call.1} parent=1 // pred_check_branch
      %67 = sbr.rel (0) target = $region29
    $region28: #{tpu_custom_call.1} parent=1 // pred_region
      _
    $region29: #{tpu_custom_call.1} parent=1 // pred_fallthru
      _
    // Predicated region
    $region30: #{tpu_custom_call.1} parent=1 // pred_check
      _
    $region31: #{tpu_custom_call.1} parent=1 // pred_check_branch
      %69 = sbr.rel (0) target = $region33
    $region32: #{tpu_custom_call.1} parent=1 // pred_region
      %70 = dma.done [#allocation3], 128
    $region33: #{tpu_custom_call.1} parent=1 // pred_fallthru
      _
    // Predicated region
    $region34: #{tpu_custom_call.1} parent=1 // pred_check
      _
    $region35: #{tpu_custom_call.1} parent=1 // pred_check_branch
      %72 = sbr.rel (0) target = $region37
    $region36: #{tpu_custom_call.1} parent=1 // pred_region
      %73 = dma.done [#allocation6], 1536
    $region37: #{tpu_custom_call.1} parent=1 // pred_fallthru
      _
    // Predicated region
    $region38: #{tpu_custom_call.1} parent=1 // pred_check
      _
    $region39: #{tpu_custom_call.1} parent=1 // pred_check_branch
      %75 = sbr.rel (0) target = $region41
    $region40: #{tpu_custom_call.1} parent=1 // pred_region
      %76 = dma.done [#allocation6], 6144
    $region41: #{tpu_custom_call.1} parent=1 // pred_fallthru
      _
    // Predicated region
    $region42: #{tpu_custom_call.1} parent=1 // pred_check
      _
    $region43: #{tpu_custom_call.1} parent=1 // pred_check_branch
      %78 = sbr.rel (0) target = $region45
    $region44: #{tpu_custom_call.1} parent=1 // pred_region
      %79 = dma.done [#allocation9], 2048
    $region45: #{tpu_custom_call.1} parent=1 // pred_fallthru
      _
    %v80 = vld [vmem:[#allocation2] sm:$0xff]
    %v81 = vld [vmem:[#allocation5] sm:$0xff]
    %v82 = vld [vmem:[#allocation5 + $0x8] sm:$0xff]
    %v83 = vld [vmem:[#allocation5 + $0x10] sm:$0xff]
    %v84 = vld [vmem:[#allocation5 + $0x18] sm:$0xff]
    %v85 = vld [vmem:[#allocation5 + $0x20] sm:$0xff]
    %v86 = vld [vmem:[#allocation5 + $0x28] sm:$0xff]
    %v87 = vld [vmem:[#allocation5 + $0x30] sm:$0xff]
    %v88 = vld [vmem:[#allocation5 + $0x38] sm:$0xff]
    %v89 = vld [vmem:[#allocation5 + $0x40] sm:$0xff]
    %v90 = vld [vmem:[#allocation5 + $0x48] sm:$0xff]
    %v91 = vld [vmem:[#allocation5 + $0x50] sm:$0xff]
    %v92 = vld [vmem:[#allocation5 + $0x58] sm:$0xff]
    %v93 = vld [vmem:[%s2] sm:$0x7]
    %v95 = vlaneseq
    %v96 = vshrl.u32 %v95, 7
    %v97 = vsub.s32 0, %v96
    %v98 = vrot.slane %v93, %v97
    %v99 = vlaneseq
    %v100 = vshrl.u32 %v99, 7
    %v101 = vsub.s32 1, %v100
    %v102 = vrot.slane %v93, %v101
    %v103 = vlaneseq
    %v104 = vshrl.u32 %v103, 7
    %v105 = vsub.s32 2, %v104
    %v106 = vrot.slane %v93, %v105
    %vm110 = vcmask 261120
    %v112 = vsel %vm110, %v80, 0
    %114 = vmatprep.subr.mxu0 %v82
    %115 = vmatpush1.msra.mxu0 %v81
    %116 = vmatprep.subr.mxu0 %v85
    %117 = vmatpush1.msra.mxu0 %v84
    %118 = vmatprep.subr.mxu0 %v88
    %119 = vmatpush1.msra.mxu0 %v87
    %120 = vmatprep.subr.mxu0 %v91
    %121 = vmatpush1.msra.mxu0 %v90
    %122 = vmatprep.subr.mxu0 0.0
    %123 = vmatpush1.msra.mxu0 0.0
    %124 = vmatprep.subr.mxu0 0.0
    %125 = vmatpush1.msra.mxu0 0.0
    %126 = vmatprep.subr.mxu0 0.0
    %127 = vmatpush1.msra.mxu0 0.0
    %128 = vmatprep.subr.mxu0 0.0
    %129 = vmatpush1.msra.mxu0 0.0
    %130 = vmatprep.subr.mxu0 0.0
    %131 = vmatpush1.msra.mxu0 0.0
    %132 = vmatprep.subr.mxu0 0.0
    %133 = vmatpush1.msra.mxu0 0.0
    %134 = vmatprep.subr.mxu0 0.0
    %135 = vmatpush1.msra.mxu0 0.0
    %136 = vmatprep.subr.mxu0 0.0
    %137 = vmatpush1.msra.mxu0 0.0
    %138 = vmatprep.subr.mxu0 0.0
    %139 = vmatpush1.msra.mxu0 0.0
    %140 = vmatprep.subr.mxu0 0.0
    %141 = vmatpush1.msra.mxu0 0.0
    %142 = vmatprep.subr.mxu0 0.0
    %143 = vmatpush1.msra.mxu0 0.0
    %144 = vmatprep.subr.mxu0 0.0
    %145 = vmatpush1.msra.mxu0 0.0
    %146 = vmatprep.subr.mxu0 0.0
    %147 = vmatpush1.msra.mxu0 0.0
    %148 = vmatprep.subr.mxu0 0.0
    %149 = vmatpush1.msra.mxu0 0.0
    %150 = vmatprep.subr.mxu0 0.0
    %151 = vmatpush1.msra.mxu0 0.0
    %152 = vmatprep.subr.mxu0 0.0
    %153 = vmatpush1.msra.mxu0 0.0
    %154 = vmatprep.subr.mxu0 0.0
    %155 = vmatpush1.msra.mxu0 0.0
    %156 = vmatprep.subr.mxu0 0.0
    %157 = vmatpush1.msra.mxu0 0.0
    %158 = vmatprep.subr.mxu0 0.0
    %159 = vmatpush1.msra.mxu0 0.0
    %160 = vmatprep.subr.mxu0 0.0
    %161 = vmatpush1.msra.mxu0 0.0
    %162 = vmatprep.subr.mxu0 0.0
    %163 = vmatpush1.msra.mxu0 0.0
    %164 = vmatprep.subr.mxu0 0.0
    %165 = vmatpush1.msra.mxu0 0.0
    %166 = vmatprep.subr.mxu0 0.0
    %167 = vmatpush1.msra.mxu0 0.0
    %168 = vmatprep.subr.mxu0 0.0
    %169 = vmatpush1.msra.mxu0 0.0
    %170 = vmatprep.subr.mxu0 0.0
    %171 = vmatpush1.msra.mxu0 0.0
    %172 = vmatprep.subr.mxu0 0.0
    %173 = vmatpush1.msra.mxu0 0.0
    %174 = vmatprep.subr.mxu0 0.0
    %175 = vmatpush1.msra.mxu0 0.0
    %176 = vmatprep.subr.mxu0 0.0
    %177 = vmatpush1.msra.mxu0 0.0
    %178 = vmatprep.mubr.f32.mxu0 0.0
    %179 = vmatmul.mubr.f32.gmra.mrb[0].mxu0 %v112
    %v180 = vpop.f32.mrb[0].mxu0
    %v181 = vadd.f32 %v98, %v180
    %v182 = vpop.f32.mrb[0].mxu0
    %v183 = vadd.f32 %v102, %v182
    %184 = vdwg.mxu0
    %185 = vmatprep.subr.mxu0 0.0
    %186 = vmatpush1.msra.mxu0 %v83
    %187 = vmatprep.subr.mxu0 0.0
    %188 = vmatpush1.msra.mxu0 %v86
    %189 = vmatprep.subr.mxu0 0.0
    %190 = vmatpush1.msra.mxu0 %v89
    %191 = vmatprep.subr.mxu0 0.0
    %192 = vmatpush1.msra.mxu0 %v92
    %193 = vmatprep.subr.mxu0 0.0
    %194 = vmatpush1.msra.mxu0 0.0
    %195 = vmatprep.subr.mxu0 0.0
    %196 = vmatpush1.msra.mxu0 0.0
    %197 = vmatprep.subr.mxu0 0.0
    %198 = vmatpush1.msra.mxu0 0.0
    %199 = vmatprep.subr.mxu0 0.0
    %200 = vmatpush1.msra.mxu0 0.0
    %201 = vmatprep.subr.mxu0 0.0
    %202 = vmatpush1.msra.mxu0 0.0
    %203 = vmatprep.subr.mxu0 0.0
    %204 = vmatpush1.msra.mxu0 0.0
    %205 = vmatprep.subr.mxu0 0.0
    %206 = vmatpush1.msra.mxu0 0.0
    %207 = vmatprep.subr.mxu0 0.0
    %208 = vmatpush1.msra.mxu0 0.0
    %209 = vmatprep.subr.mxu0 0.0
    %210 = vmatpush1.msra.mxu0 0.0
    %211 = vmatprep.subr.mxu0 0.0
    %212 = vmatpush1.msra.mxu0 0.0
    %213 = vmatprep.subr.mxu0 0.0
    %214 = vmatpush1.msra.mxu0 0.0
    %215 = vmatprep.subr.mxu0 0.0
    %216 = vmatpush1.msra.mxu0 0.0
    %217 = vmatprep.subr.mxu0 0.0
    %218 = vmatpush1.msra.mxu0 0.0
    %219 = vmatprep.subr.mxu0 0.0
    %220 = vmatpush1.msra.mxu0 0.0
    %221 = vmatprep.subr.mxu0 0.0
    %222 = vmatpush1.msra.mxu0 0.0
    %223 = vmatprep.subr.mxu0 0.0
    %224 = vmatpush1.msra.mxu0 0.0
    %225 = vmatprep.subr.mxu0 0.0
    %226 = vmatpush1.msra.mxu0 0.0
    %227 = vmatprep.subr.mxu0 0.0
    %228 = vmatpush1.msra.mxu0 0.0
    %229 = vmatprep.subr.mxu0 0.0
    %230 = vmatpush1.msra.mxu0 0.0
    %231 = vmatprep.subr.mxu0 0.0
    %232 = vmatpush1.msra.mxu0 0.0
    %233 = vmatprep.subr.mxu0 0.0
    %234 = vmatpush1.msra.mxu0 0.0
    %235 = vmatprep.subr.mxu0 0.0
    %236 = vmatpush1.msra.mxu0 0.0
    %237 = vmatprep.subr.mxu0 0.0
    %238 = vmatpush1.msra.mxu0 0.0
    %239 = vmatprep.subr.mxu0 0.0
    %240 = vmatpush1.msra.mxu0 0.0
    %241 = vmatprep.subr.mxu0 0.0
    %242 = vmatpush1.msra.mxu0 0.0
    %243 = vmatprep.subr.mxu0 0.0
    %244 = vmatpush1.msra.mxu0 0.0
    %245 = vmatprep.subr.mxu0 0.0
    %246 = vmatpush1.msra.mxu0 0.0
    %247 = vmatprep.subr.mxu0 0.0
    %248 = vmatpush1.msra.mxu0 0.0
    %249 = vmatprep.mubr.f32.mxu0 0.0
    %250 = vmatmul.mubr.f32.gmra.mrb[0].mxu0 %v112
    %v251 = vpop.f32.mrb[0].mxu0
    %v252 = vadd.f32 %v106, %v251
    %v253 = vpop.f32.mrb[0].mxu0
    %254 = vdwg.mxu0
    %v255 = vmax.f32 %v181, 0.0
    %v256 = vmax.f32 %v183, 0.0
    %v257 = vmax.f32 %v252, 0.0
    %v258 = vld [vmem:[#allocation7] sm:$0xff]
    %v259 = vld [vmem:[#allocation7 + $0x8] sm:$0xff]
    %v260 = vld [vmem:[#allocation7 + $0x10] sm:$0xff]
    %v261 = vld [vmem:[#allocation7 + $0x18] sm:$0xff]
    %v262 = vld [vmem:[#allocation7 + $0x20] sm:$0xff]
    %v263 = vld [vmem:[#allocation7 + $0x28] sm:$0xff]
    %v264 = vld [vmem:[#allocation7 + $0x30] sm:$0xff]
    %v265 = vld [vmem:[#allocation7 + $0x38] sm:$0xff]
    %v266 = vld [vmem:[#allocation7 + $0x40] sm:$0xff]
    %v267 = vld [vmem:[#allocation7 + $0x48] sm:$0xff]
    %v268 = vld [vmem:[#allocation7 + $0x50] sm:$0xff]
    %v269 = vld [vmem:[#allocation7 + $0x58] sm:$0xff]
    %v270 = vld [vmem:[#allocation7 + $0x60] sm:$0xff]
    %v271 = vld [vmem:[#allocation7 + $0x68] sm:$0xff]
    %v272 = vld [vmem:[#allocation7 + $0x70] sm:$0xff]
    %v273 = vld [vmem:[#allocation7 + $0x78] sm:$0xff]
    %v274 = vld [vmem:[#allocation7 + $0x80] sm:$0xff]
    %v275 = vld [vmem:[#allocation7 + $0x88] sm:$0xff]
    %v276 = vld [vmem:[#allocation7 + $0x90] sm:$0xff]
    %v277 = vld [vmem:[#allocation7 + $0x98] sm:$0xff]
    %v278 = vld [vmem:[#allocation7 + $0xa0] sm:$0xff]
    %v279 = vld [vmem:[#allocation7 + $0xa8] sm:$0xff]
    %v280 = vld [vmem:[#allocation7 + $0xb0] sm:$0xff]
    %v281 = vld [vmem:[#allocation7 + $0xb8] sm:$0xff]
    %v282 = vld [vmem:[#allocation7 + $0xc0] sm:$0xff]
    %v283 = vld [vmem:[#allocation7 + $0xc8] sm:$0xff]
    %v284 = vld [vmem:[#allocation7 + $0xd0] sm:$0xff]
    %v285 = vld [vmem:[#allocation7 + $0xd8] sm:$0xff]
    %v286 = vld [vmem:[#allocation7 + $0xe0] sm:$0xff]
    %v287 = vld [vmem:[#allocation7 + $0xe8] sm:$0xff]
    %v288 = vld [vmem:[#allocation7 + $0xf0] sm:$0xff]
    %v289 = vld [vmem:[#allocation7 + $0xf8] sm:$0xff]
    %v290 = vld [vmem:[#allocation7 + $0x100] sm:$0xff]
    %v291 = vld [vmem:[#allocation7 + $0x108] sm:$0xff]
    %v292 = vld [vmem:[#allocation7 + $0x110] sm:$0xff]
    %v293 = vld [vmem:[#allocation7 + $0x118] sm:$0xff]
    %v294 = vld [vmem:[#allocation7 + $0x120] sm:$0xff]
    %v295 = vld [vmem:[#allocation7 + $0x128] sm:$0xff]
    %v296 = vld [vmem:[#allocation7 + $0x130] sm:$0xff]
    %v297 = vld [vmem:[#allocation7 + $0x138] sm:$0xff]
    %v298 = vld [vmem:[#allocation7 + $0x140] sm:$0xff]
    %v299 = vld [vmem:[#allocation7 + $0x148] sm:$0xff]
    %v300 = vld [vmem:[#allocation7 + $0x150] sm:$0xff]
    %v301 = vld [vmem:[#allocation7 + $0x158] sm:$0xff]
    %v302 = vld [vmem:[#allocation7 + $0x160] sm:$0xff]
    %v303 = vld [vmem:[#allocation7 + $0x168] sm:$0xff]
    %v304 = vld [vmem:[#allocation7 + $0x170] sm:$0xff]
    %v305 = vld [vmem:[#allocation7 + $0x178] sm:$0xff]
    %v306 = vld [vmem:[%s4] sm:$0x1]
    %v308 = vlaneseq
    %v309 = vshrl.u32 %v308, 7
    %v310 = vsub.s32 0, %v309
    %v311 = vrot.slane %v306, %v310
    %313 = vmatprep.subr.mxu0 0.0
    %314 = vmatpush1.msra.mxu0 %v258
    %315 = vmatprep.subr.mxu0 0.0
    %316 = vmatpush1.msra.mxu0 %v259
    %317 = vmatprep.subr.mxu0 0.0
    %318 = vmatpush1.msra.mxu0 %v260
    %319 = vmatprep.subr.mxu0 0.0
    %320 = vmatpush1.msra.mxu0 %v261
    %321 = vmatprep.subr.mxu0 0.0
    %322 = vmatpush1.msra.mxu0 %v262
    %323 = vmatprep.subr.mxu0 0.0
    %324 = vmatpush1.msra.mxu0 %v263
    %325 = vmatprep.subr.mxu0 0.0
    %326 = vmatpush1.msra.mxu0 %v264
    %327 = vmatprep.subr.mxu0 0.0
    %328 = vmatpush1.msra.mxu0 %v265
    %329 = vmatprep.subr.mxu0 0.0
    %330 = vmatpush1.msra.mxu0 %v266
    %331 = vmatprep.subr.mxu0 0.0
    %332 = vmatpush1.msra.mxu0 %v267
    %333 = vmatprep.subr.mxu0 0.0
    %334 = vmatpush1.msra.mxu0 %v268
    %335 = vmatprep.subr.mxu0 0.0
    %336 = vmatpush1.msra.mxu0 %v269
    %337 = vmatprep.subr.mxu0 0.0
    %338 = vmatpush1.msra.mxu0 %v270
    %339 = vmatprep.subr.mxu0 0.0
    %340 = vmatpush1.msra.mxu0 %v271
    %341 = vmatprep.subr.mxu0 0.0
    %342 = vmatpush1.msra.mxu0 %v272
    %343 = vmatprep.subr.mxu0 0.0
    %344 = vmatpush1.msra.mxu0 %v273
    %345 = vmatprep.subr.mxu0 0.0
    %346 = vmatpush1.msra.mxu0 %v274
    %347 = vmatprep.subr.mxu0 0.0
    %348 = vmatpush1.msra.mxu0 %v275
    %349 = vmatprep.subr.mxu0 0.0
    %350 = vmatpush1.msra.mxu0 %v276
    %351 = vmatprep.subr.mxu0 0.0
    %352 = vmatpush1.msra.mxu0 %v277
    %353 = vmatprep.subr.mxu0 0.0
    %354 = vmatpush1.msra.mxu0 %v278
    %355 = vmatprep.subr.mxu0 0.0
    %356 = vmatpush1.msra.mxu0 %v279
    %357 = vmatprep.subr.mxu0 0.0
    %358 = vmatpush1.msra.mxu0 %v280
    %359 = vmatprep.subr.mxu0 0.0
    %360 = vmatpush1.msra.mxu0 %v281
    %361 = vmatprep.subr.mxu0 0.0
    %362 = vmatpush1.msra.mxu0 %v282
    %363 = vmatprep.subr.mxu0 0.0
    %364 = vmatpush1.msra.mxu0 %v283
    %365 = vmatprep.subr.mxu0 0.0
    %366 = vmatpush1.msra.mxu0 %v284
    %367 = vmatprep.subr.mxu0 0.0
    %368 = vmatpush1.msra.mxu0 %v285
    %369 = vmatprep.subr.mxu0 0.0
    %370 = vmatpush1.msra.mxu0 %v286
    %371 = vmatprep.subr.mxu0 0.0
    %372 = vmatpush1.msra.mxu0 %v287
    %373 = vmatprep.subr.mxu0 0.0
    %374 = vmatpush1.msra.mxu0 %v288
    %375 = vmatprep.subr.mxu0 0.0
    %376 = vmatpush1.msra.mxu0 %v289
    %377 = vmatprep.mubr.f32.mxu0 %v256
    %378 = vmatmul.mubr.f32.gmra.mrb[0].mxu0 %v255
    %v379 = vpop.f32.mrb[0].mxu0
    %v380 = vadd.f32 %v311, %v379
    %v381 = vpop.f32.mrb[0].mxu0
    %382 = vdwg.mxu0
    %383 = vmatprep.subr.mxu0 0.0
    %384 = vmatpush1.msra.mxu0 %v290
    %385 = vmatprep.subr.mxu0 0.0
    %386 = vmatpush1.msra.mxu0 %v291
    %387 = vmatprep.subr.mxu0 0.0
    %388 = vmatpush1.msra.mxu0 %v292
    %389 = vmatprep.subr.mxu0 0.0
    %390 = vmatpush1.msra.mxu0 %v293
    %391 = vmatprep.subr.mxu0 0.0
    %392 = vmatpush1.msra.mxu0 %v294
    %393 = vmatprep.subr.mxu0 0.0
    %394 = vmatpush1.msra.mxu0 %v295
    %395 = vmatprep.subr.mxu0 0.0
    %396 = vmatpush1.msra.mxu0 %v296
    %397 = vmatprep.subr.mxu0 0.0
    %398 = vmatpush1.msra.mxu0 %v297
    %399 = vmatprep.subr.mxu0 0.0
    %400 = vmatpush1.msra.mxu0 %v298
    %401 = vmatprep.subr.mxu0 0.0
    %402 = vmatpush1.msra.mxu0 %v299
    %403 = vmatprep.subr.mxu0 0.0
    %404 = vmatpush1.msra.mxu0 %v300
    %405 = vmatprep.subr.mxu0 0.0
    %406 = vmatpush1.msra.mxu0 %v301
    %407 = vmatprep.subr.mxu0 0.0
    %408 = vmatpush1.msra.mxu0 %v302
    %409 = vmatprep.subr.mxu0 0.0
    %410 = vmatpush1.msra.mxu0 %v303
    %411 = vmatprep.subr.mxu0 0.0
    %412 = vmatpush1.msra.mxu0 %v304
    %413 = vmatprep.subr.mxu0 0.0
    %414 = vmatpush1.msra.mxu0 %v305
    %415 = vmatprep.subr.mxu0 0.0
    %416 = vmatpush1.msra.mxu0 0.0
    %417 = vmatprep.subr.mxu0 0.0
    %418 = vmatpush1.msra.mxu0 0.0
    %419 = vmatprep.subr.mxu0 0.0
    %420 = vmatpush1.msra.mxu0 0.0
    %421 = vmatprep.subr.mxu0 0.0
    %422 = vmatpush1.msra.mxu0 0.0
    %423 = vmatprep.subr.mxu0 0.0
    %424 = vmatpush1.msra.mxu0 0.0
    %425 = vmatprep.subr.mxu0 0.0
    %426 = vmatpush1.msra.mxu0 0.0
    %427 = vmatprep.subr.mxu0 0.0
    %428 = vmatpush1.msra.mxu0 0.0
    %429 = vmatprep.subr.mxu0 0.0
    %430 = vmatpush1.msra.mxu0 0.0
    %431 = vmatprep.subr.mxu0 0.0
    %432 = vmatpush1.msra.mxu0 0.0
    %433 = vmatprep.subr.mxu0 0.0
    %434 = vmatpush1.msra.mxu0 0.0
    %435 = vmatprep.subr.mxu0 0.0
    %436 = vmatpush1.msra.mxu0 0.0
    %437 = vmatprep.subr.mxu0 0.0
    %438 = vmatpush1.msra.mxu0 0.0
    %439 = vmatprep.subr.mxu0 0.0
    %440 = vmatpush1.msra.mxu0 0.0
    %441 = vmatprep.subr.mxu0 0.0
    %442 = vmatpush1.msra.mxu0 0.0
    %443 = vmatprep.subr.mxu0 0.0
    %444 = vmatpush1.msra.mxu0 0.0
    %445 = vmatprep.subr.mxu0 0.0
    %446 = vmatpush1.msra.mxu0 0.0
    %447 = vmatprep.mubr.f32.mxu0 0.0
    %448 = vmatmul.mubr.f32.gmra.mrb[0].mxu0 %v257
    %v449 = vpop.f32.mrb[0].mxu0
    %v450 = vadd.f32 %v380, %v449
    %v451 = vpop.f32.mrb[0].mxu0
    %452 = vdwg.mxu0
    %v453 = vmax.f32 %v450, 0.0
    %v454 = vld [vmem:[#allocation8] sm:$0xff]
    %v455 = vld [vmem:[#allocation8 + $0x8] sm:$0xff]
    %v456 = vld [vmem:[#allocation8 + $0x10] sm:$0xff]
    %v457 = vld [vmem:[#allocation8 + $0x18] sm:$0xff]
    %v458 = vld [vmem:[#allocation8 + $0x20] sm:$0xff]
    %v459 = vld [vmem:[#allocation8 + $0x28] sm:$0xff]
    %v460 = vld [vmem:[#allocation8 + $0x30] sm:$0xff]
    %v461 = vld [vmem:[#allocation8 + $0x38] sm:$0xff]
    %v462 = vld [vmem:[#allocation8 + $0x40] sm:$0xff]
    %v463 = vld [vmem:[#allocation8 + $0x48] sm:$0xff]
    %v464 = vld [vmem:[#allocation8 + $0x50] sm:$0xff]
    %v465 = vld [vmem:[#allocation8 + $0x58] sm:$0xff]
    %v466 = vld [vmem:[#allocation8 + $0x60] sm:$0xff]
    %v467 = vld [vmem:[#allocation8 + $0x68] sm:$0xff]
    %v468 = vld [vmem:[#allocation8 + $0x70] sm:$0xff]
    %v469 = vld [vmem:[#allocation8 + $0x78] sm:$0xff]
    %v470 = vld [vmem:[%s6] sm:$0x1]
    %v472 = vlaneseq
    %v473 = vshrl.u32 %v472, 7
    %v474 = vsub.s32 0, %v473
    %v475 = vrot.slane %v470, %v474
    %477 = vmatprep.subr.mxu0 0.0
    %478 = vmatpush1.msra.mxu0 %v454
    %479 = vmatprep.subr.mxu0 0.0
    %480 = vmatpush1.msra.mxu0 %v455
    %481 = vmatprep.subr.mxu0 0.0
    %482 = vmatpush1.msra.mxu0 %v456
    %483 = vmatprep.subr.mxu0 0.0
    %484 = vmatpush1.msra.mxu0 %v457
    %485 = vmatprep.subr.mxu0 0.0
    %486 = vmatpush1.msra.mxu0 %v458
    %487 = vmatprep.subr.mxu0 0.0
    %488 = vmatpush1.msra.mxu0 %v459
    %489 = vmatprep.subr.mxu0 0.0
    %490 = vmatpush1.msra.mxu0 %v460
    %491 = vmatprep.subr.mxu0 0.0
    %492 = vmatpush1.msra.mxu0 %v461
    %493 = vmatprep.subr.mxu0 0.0
    %494 = vmatpush1.msra.mxu0 %v462
    %495 = vmatprep.subr.mxu0 0.0
    %496 = vmatpush1.msra.mxu0 %v463
    %497 = vmatprep.subr.mxu0 0.0
    %498 = vmatpush1.msra.mxu0 %v464
    %499 = vmatprep.subr.mxu0 0.0
    %500 = vmatpush1.msra.mxu0 %v465
    %501 = vmatprep.subr.mxu0 0.0
    %502 = vmatpush1.msra.mxu0 %v466
    %503 = vmatprep.subr.mxu0 0.0
    %504 = vmatpush1.msra.mxu0 %v467
    %505 = vmatprep.subr.mxu0 0.0
    %506 = vmatpush1.msra.mxu0 %v468
    %507 = vmatprep.subr.mxu0 0.0
    %508 = vmatpush1.msra.mxu0 %v469
    %509 = vmatprep.subr.mxu0 0.0
    %510 = vmatpush1.msra.mxu0 0.0
    %511 = vmatprep.subr.mxu0 0.0
    %512 = vmatpush1.msra.mxu0 0.0
    %513 = vmatprep.subr.mxu0 0.0
    %514 = vmatpush1.msra.mxu0 0.0
    %515 = vmatprep.subr.mxu0 0.0
    %516 = vmatpush1.msra.mxu0 0.0
    %517 = vmatprep.subr.mxu0 0.0
    %518 = vmatpush1.msra.mxu0 0.0
    %519 = vmatprep.subr.mxu0 0.0
    %520 = vmatpush1.msra.mxu0 0.0
    %521 = vmatprep.subr.mxu0 0.0
    %522 = vmatpush1.msra.mxu0 0.0
    %523 = vmatprep.subr.mxu0 0.0
    %524 = vmatpush1.msra.mxu0 0.0
    %525 = vmatprep.subr.mxu0 0.0
    %526 = vmatpush1.msra.mxu0 0.0
    %527 = vmatprep.subr.mxu0 0.0
    %528 = vmatpush1.msra.mxu0 0.0
    %529 = vmatprep.subr.mxu0 0.0
    %530 = vmatpush1.msra.mxu0 0.0
    %531 = vmatprep.subr.mxu0 0.0
    %532 = vmatpush1.msra.mxu0 0.0
    %533 = vmatprep.subr.mxu0 0.0
    %534 = vmatpush1.msra.mxu0 0.0
    %535 = vmatprep.subr.mxu0 0.0
    %536 = vmatpush1.msra.mxu0 0.0
    %537 = vmatprep.subr.mxu0 0.0
    %538 = vmatpush1.msra.mxu0 0.0
    %539 = vmatprep.subr.mxu0 0.0
    %540 = vmatpush1.msra.mxu0 0.0
    %541 = vmatprep.mubr.f32.mxu0 0.0
    %542 = vmatmul.mubr.f32.gmra.mrb[0].mxu0 %v453
    %v543 = vpop.f32.mrb[0].mxu0
    %v544 = vadd.f32 %v475, %v543
    %v545 = vpop.f32.mrb[0].mxu0
    %546 = vdwg.mxu0
    %547 = vst [vmem:[#allocation10] sm:$0xff] %v544
    // Predicated region
    $region46: #{tpu_custom_call.1} parent=1 // pred_check
      _
    $region47: #{tpu_custom_call.1} parent=1 // pred_check_branch
      %549 = sbr.rel (0) target = $region49
    $region48: #{tpu_custom_call.1} parent=1 // pred_region
      %s551 = ssub.s32 128, 128
      %552 = vsyncadd [#allocation4], %s551
      %s554 = sshll.u32 [#allocation10], 4
      %s555 = int_to_ptr.vmem [resolvable:$true] %s554
      %557 = dma.vmem_to_hbm [thread:$0]  %s555, 128, %s7, [#allocation4]
    $region49: #{tpu_custom_call.1} parent=1 // pred_fallthru
      _
    // Predicated region
    $region50: #{tpu_custom_call.1} parent=1 // pred_check
      _
    $region51: #{tpu_custom_call.1} parent=1 // pred_check_branch
      %559 = sbr.rel (0) target = $region53
    $region52: #{tpu_custom_call.1} parent=1 // pred_region
      %560 = dma.done [#allocation4], 128
    $region53: #{tpu_custom_call.1} parent=1 // pred_fallthru
      _
    %561 = vsyncpa [#allocation3], 1
    %562 = vsyncpa [#allocation6], 1
    %563 = vsyncpa [#allocation9], 1
    %564 = vsyncpa [#allocation4], 1

</llo_original>
